<compile_context>
chip_gen: v6e
topology: v6e:2x2x1
jax: 0.10.0
libtpu: 0.0.40
codegen_flags: <defaults>
</compile_context>

<pallas_src>
import jax
import jax.numpy as jnp
from jax import lax
from jax.experimental import pallas as pl
from jax.experimental.pallas import tpu as pltpu

KSIZE = 8
STRIDE = 4
PAD = 2


# ---------------------------- Pallas kernels ----------------------------

def _gemm_epilogue_kernel(w_ref, p_ref, b_ref, meta_ref, o_ref):
    # out = PReLU(W @ P + b, alpha)         meta = [alpha, res_sign(unused)]
    acc = jnp.dot(w_ref[...], p_ref[...], preferred_element_type=jnp.float32)
    acc = acc + b_ref[...]
    alpha = meta_ref[0]
    o_ref[...] = jnp.where(acc >= 0.0, acc, alpha * acc)


def _gemm_epilogue_res_kernel(w_ref, p_ref, b_ref, meta_ref, r_ref, o_ref):
    # out = PReLU(W @ P + b, alpha) + sign * residual    meta = [alpha, sign]
    acc = jnp.dot(w_ref[...], p_ref[...], preferred_element_type=jnp.float32)
    acc = acc + b_ref[...]
    alpha = meta_ref[0]
    y = jnp.where(acc >= 0.0, acc, alpha * acc)
    o_ref[...] = y + meta_ref[1] * r_ref[...]


def _round_up(x, m):
    return ((x + m - 1) // m) * m


def conv_gemm(w_mat, patches, bias, alpha, residual=None, res_sign=1.0, tm=512):
    """out[Cout, M] = PReLU(w_mat @ patches + bias, alpha) (+ res_sign*residual).

    w_mat:    (Cout, K)   cast to bf16 for the MXU
    patches:  (K, M)      im2col patches, pixel axis M on lanes, cast to bf16
    bias:     (Cout,)     f32 (resident, constant index_map)
    residual: (Cout, M)   f32 or None (fused in the epilogue)
    """
    Cout, K = w_mat.shape
    K2, M = patches.shape
    assert K == K2

    # ---- lane tiling over the pixel axis M -----------------------------
    tm_eff = max(128, (min(tm, _round_up(M, 128)) // 128) * 128)
    if _round_up(M, tm_eff) // tm_eff == 1 and tm_eff >= 256:
        # prefer >=2 parallel grid steps so both v7x TensorCores get work
        tm_eff = _round_up(tm_eff // 2, 128)
    m_pad = _round_up(M, tm_eff)
    grid = (m_pad // tm_eff,)

    # ---- operand prep: bf16 MXU inputs, f32 epilogue operands ----------
    patches = jnp.pad(patches, ((0, 0), (0, m_pad - M))).astype(jnp.bfloat16)
    w_mat = w_mat.astype(jnp.bfloat16)
    bias = bias.reshape(Cout, 1).astype(jnp.float32)
    meta = jnp.stack([jnp.asarray(alpha, jnp.float32).reshape(()),
                      jnp.asarray(res_sign, jnp.float32).reshape(())])

    in_specs = [
        pl.BlockSpec((Cout, K), lambda i: (0, 0)),           # weight (resident)
        pl.BlockSpec((K, tm_eff), lambda i: (0, i)),          # patch tile (lane-tiled)
        pl.BlockSpec((Cout, 1), lambda i: (0, 0)),            # bias (resident)
        pl.BlockSpec(memory_space=pltpu.MemorySpace.SMEM),    # [alpha, res_sign]
    ]
    args = [w_mat, patches, bias, meta]
    kernel = _gemm_epilogue_kernel
    if residual is not None:
        residual = jnp.pad(residual.astype(jnp.float32), ((0, 0), (0, m_pad - M)))
        in_specs.append(pl.BlockSpec((Cout, tm_eff), lambda i: (0, i)))
        args.append(residual)
        kernel = _gemm_epilogue_res_kernel

    out = pl.pallas_call(
        kernel,
        out_shape=jax.ShapeDtypeStruct((Cout, m_pad), jnp.float32),
        grid=grid,
        in_specs=in_specs,
        out_specs=pl.BlockSpec((Cout, tm_eff), lambda i: (0, i)),
        compiler_params=pltpu.CompilerParams(
            dimension_semantics=("parallel",),
            vmem_limit_bytes=32 * 1024 * 1024),
    )(*args)
    return out[:, :M]


# ------------------------------ glue (JAX) ------------------------------
# TODO(synk): pull im2col into the kernel via an (oh, ow)-tiled BlockSpec
# index_map over overlapping input windows to avoid materializing patches in HBM.

def _im2col_nchw(x, ksize, stride, pad):
    """x: (N, C, H, W) -> patches (C*k*k, N*Ho*Wo); row order (ci, kh, kw),
    column order (n, oh, ow)."""
    if pad > 0:
        x = jnp.pad(x, ((0, 0), (0, 0), (pad, pad), (pad, pad)))
    N, C, Hp, Wp = x.shape
    Ho = (Hp - ksize) // stride + 1
    Wo = (Wp - ksize) // stride + 1
    ih = jnp.arange(Ho)[:, None] * stride + jnp.arange(ksize)[None, :]   # (Ho, k)
    iw = jnp.arange(Wo)[:, None] * stride + jnp.arange(ksize)[None, :]   # (Wo, k)
    p = x[:, :, ih]                      # (N, C, Ho, k, Wp)
    p = p[:, :, :, :, iw]                # (N, C, Ho, k, Wo, k)
    p = p.transpose(1, 3, 5, 0, 2, 4)    # (C, kh, kw, N, Ho, Wo)
    return p.reshape(C * ksize * ksize, N * Ho * Wo), Ho, Wo


def _pixel_shuffle_cols(y_flat, c_out, n, h_in, w_in, r=2):
    """(c_out*r*r, n*h_in*w_in) flat GEMM output -> NCHW (n, c_out, h_in*r, w_in*r),
    PyTorch PixelShuffle semantics: out[n,c,h*r+i,w*r+j] = in[n, c*r*r+i*r+j, h, w]."""
    y = y_flat.reshape(c_out, r, r, n, h_in, w_in)
    y = y.transpose(3, 0, 4, 1, 5, 2)            # (n, c, h, i, w, j)
    return y.reshape(n, c_out, h_in * r, w_in * r)


def _pixel_unshuffle_cols(x, r=2):
    """Inverse PixelShuffle into flat GEMM-column layout:
    (N, C, H, W) -> (C*r*r, N*(H//r)*(W//r)), rows ordered c*r*r + i*r + j."""
    N, C, H, W = x.shape
    H2, W2 = H // r, W // r
    z = x.reshape(N, C, H2, r, W2, r)
    z = z.transpose(1, 3, 5, 0, 2, 4)            # (C, i, j, N, H2, W2)
    return z.reshape(C * r * r, N * H2 * W2)


def down_block_pix_forward(x, p):
    """DownBlockPix.forward; x: (N, C, H, W) NCHW; out: (N, C, H//4, W//4)."""
    N, C, H, W = x.shape

    # down_conv1: l0 = PReLU(Conv(k=8, s=4, p=2)(x) + b1, a1)
    p1, Ho, Wo = _im2col_nchw(x, KSIZE, STRIDE, PAD)
    l0_flat = conv_gemm(p["w1"].reshape(C, -1), p1, p["b1"], p["a1"])     # (C, N*Ho*Wo)

    # down_conv2 (Upsampler scale=4), stage 1: Conv3x3 (C->4C, no act) + PixelShuffle(2)
    l0_nchw = l0_flat.reshape(C, N, Ho, Wo).transpose(1, 0, 2, 3)
    pa, _, _ = _im2col_nchw(l0_nchw, 3, 1, 1)
    ya = conv_gemm(p["wu1"].reshape(4 * C, -1), pa, p["bu1"], alpha=1.0)  # alpha=1 -> identity
    sa = _pixel_shuffle_cols(ya, C, N, Ho, Wo, r=2)                       # (N, C, H/2, W/2)

    # Upsampler stage 2 + final PReLU + (h0 - x), fused in the GEMM epilogue:
    # h0 - x = PixelShuffle( PReLU(Conv3x3(sa)+b, au) - PixelUnshuffle(x) )
    pb, Hb, Wb = _im2col_nchw(sa, 3, 1, 1)
    x_pre = _pixel_unshuffle_cols(x, r=2)                                 # (4C, N*Hb*Wb)
    dflat = conv_gemm(p["wu2"].reshape(4 * C, -1), pb, p["bu2"], p["au"],
                      residual=x_pre, res_sign=-1.0)
    diff = _pixel_shuffle_cols(dflat, C, N, Hb, Wb, r=2)                  # (N, C, H, W) = h0 - x

    # down_conv3 (+ l0): out = PReLU(Conv(k=8, s=4, p=2)(h0 - x) + b3, a3) + l0
    p3, Ho3, Wo3 = _im2col_nchw(diff, KSIZE, STRIDE, PAD)
    out_flat = conv_gemm(p["w3"].reshape(C, -1), p3, p["b3"], p["a3"],
                         residual=l0_flat, res_sign=1.0)
    return out_flat.reshape(C, N, Ho3, Wo3).transpose(1, 0, 2, 3)


# ------------------------- params & reference ---------------------------

def init_params(key, num_filter):
    C = num_filter
    k = KSIZE
    keys = jax.random.split(key, 8)
    s = 0.05
    return dict(
        # down_conv1 / down_conv3: Conv2d(C, C, 8, 4, 2) + PReLU (scalar alpha)
        w1=jax.random.normal(keys[0], (C, C, k, k), jnp.float32) * s,
        b1=jax.random.normal(keys[1], (C,), jnp.float32) * s,
        a1=jnp.array(0.25, jnp.float32),
        w3=jax.random.normal(keys[2], (C, C, k, k), jnp.float32) * s,
        b3=jax.random.normal(keys[3], (C,), jnp.float32) * s,
        a3=jnp.array(0.3, jnp.float32),
        # Upsampler(scale=4): 2 x [Conv2d(C, 4C, 3, 1, 1, no act) + PixelShuffle(2)], then PReLU
        wu1=jax.random.normal(keys[4], (4 * C, C, 3, 3), jnp.float32) * s,
        bu1=jax.random.normal(keys[5], (4 * C,), jnp.float32) * s,
        wu2=jax.random.normal(keys[6], (4 * C, C, 3, 3), jnp.float32) * s,
        bu2=jax.random.normal(keys[7], (4 * C,), jnp.float32) * s,
        au=jnp.array(0.2, jnp.float32),
    )


def ref_forward(x, p):
    """Pure-JAX (lax.conv) reference for correctness checking (f32)."""
    dn = ('NCHW', 'OIHW', 'NCHW')

    def conv(x, w, b, stride, pad):
        y = lax.conv_general_dilated(x, w, (stride, stride),
                                     [(pad, pad), (pad, pad)],
                                     dimension_numbers=dn)
        return y + b.reshape(1, -1, 1, 1)

    def prelu(v, a):
        return jnp.where(v >= 0, v, a * v)

    def pixel_shuffle(v, r):
        N, Crr, H, W = v.shape
        C = Crr // (r * r)
        return (v.reshape(N, C, r, r, H, W)
                 .transpose(0, 1, 4, 2, 5, 3)
                 .reshape(N, C, H * r, W * r))

    l0 = prelu(conv(x, p["w1"], p["b1"], STRIDE, PAD), p["a1"])
    u = pixel_shuffle(conv(l0, p["wu1"], p["bu1"], 1, 1), 2)
    u = pixel_shuffle(conv(u, p["wu2"], p["bu2"], 1, 1), 2)
    h0 = prelu(u, p["au"])
    l1 = prelu(conv(h0 - x, p["w3"], p["b3"], STRIDE, PAD), p["a3"])
    return l1 + l0


# --------------------------------- main ----------------------------------

if __name__ == "__main__":
    key = jax.random.PRNGKey(0)
    kp, kx = jax.random.split(key)
    N, C, H, W = 2, 4, 16, 16            # num_filter = 4, scale = 4
    params = init_params(kp, C)
    x = jax.random.normal(kx, (N, C, H, W), jnp.float32)   # NCHW input

    out = jax.jit(down_block_pix_forward)(x, params)
    out = jax.block_until_ready(out)
    assert out.shape == (N, C, H // STRIDE, W // STRIDE), out.shape

    ref = ref_forward(x, params)
    max_err = float(jnp.max(jnp.abs(out - ref)))
    # bf16 MXU inputs with f32 accumulation -> allow bf16-level mismatch vs f32 ref.
    assert jnp.allclose(out, ref, atol=5e-2, rtol=5e-2), max_err

    print("KERNEL_OK")
</pallas_src>

<mosaic_0001>
module attributes {stable_mosaic.version = 11 : i64} {
  func.func @_gemm_epilogue_kernel(%arg0: i32, %arg1: memref<4x256xbf16, #tpu.memory_space<vmem>>, %arg2: memref<256x128xbf16, #tpu.memory_space<vmem>>, %arg3: memref<4x1xf32, #tpu.memory_space<vmem>>, %arg4: memref<2xf32, #tpu.memory_space<smem>>, %arg5: memref<4x128xf32, #tpu.memory_space<vmem>>) attributes {dimension_semantics = [#tpu.dimension_semantics<parallel>], iteration_bounds = array<i64: 1>, scalar_prefetch = 0 : i64, scratch_operands = 0 : i64, tpu.core_type = #tpu.core_type<tc>, window_params = [{pipeline_mode = #tpu.pipeline_mode<synchronous>, transform_indices = @transform_0, window_bounds = array<i64: 4, 256>}, {transform_indices = @transform_1, window_bounds = array<i64: 256, 128>}, {pipeline_mode = #tpu.pipeline_mode<synchronous>, transform_indices = @transform_2, window_bounds = array<i64: 4, 1>}, {transform_indices = @transform_3, window_bounds = array<i64: 2>}, {transform_indices = @transform_4, window_bounds = array<i64: 4, 128>}]} {
    %c0 = arith.constant 0 : index
    %c0_0 = arith.constant 0 : index
    %0 = vector.load %arg1[%c0, %c0_0] : memref<4x256xbf16, #tpu.memory_space<vmem>>, vector<4x256xbf16>
    %c0_1 = arith.constant 0 : index
    %c0_2 = arith.constant 0 : index
    %1 = vector.load %arg2[%c0_1, %c0_2] : memref<256x128xbf16, #tpu.memory_space<vmem>>, vector<256x128xbf16>
    %cst = arith.constant dense<0.000000e+00> : vector<4x128xf32>
    %2 = tpu.matmul %0, %1, %cst {dimension_numbers = #tpu.dot_dimension_numbers<[1], [0], [0], [1], [0, 0, 1, 1], [], []>} : vector<4x256xbf16>, vector<256x128xbf16>, vector<4x128xf32> -> vector<4x128xf32>
    %c0_3 = arith.constant 0 : index
    %c0_4 = arith.constant 0 : index
    %3 = vector.load %arg3[%c0_3, %c0_4] : memref<4x1xf32, #tpu.memory_space<vmem>>, vector<4x1xf32>
    %4 = vector.broadcast %3 : vector<4x1xf32> to vector<4x128xf32>
    %5 = arith.addf %2, %4 : vector<4x128xf32>
    %c0_5 = arith.constant 0 : index
    %6 = memref.load %arg4[%c0_5] : memref<2xf32, #tpu.memory_space<smem>>
    %cst_6 = arith.constant 0.000000e+00 : f32
    %7 = vector.broadcast %cst_6 : f32 to vector<4x128xf32>
    %8 = arith.cmpf oge, %5, %7 : vector<4x128xf32>
    %9 = vector.broadcast %6 : f32 to vector<4x128xf32>
    %10 = arith.mulf %9, %5 : vector<4x128xf32>
    %11 = arith.select %8, %5, %10 : vector<4x128xi1>, vector<4x128xf32>
    %c0_7 = arith.constant 0 : index
    %c0_8 = arith.constant 0 : index
    %12 = vector.load %arg5[%c0_7, %c0_8] : memref<4x128xf32, #tpu.memory_space<vmem>>, vector<4x128xf32>
    tpu.vector_store %arg5[%c0_7, %c0_8], %11 {strides = array<i32>} : memref<4x128xf32, #tpu.memory_space<vmem>>, vector<4x128xf32>,
    return
  }
  func.func @transform_0(%arg0: i32) -> (i32, i32) {
    %c0_i32 = arith.constant 0 : i32
    %c0_i32_0 = arith.constant 0 : i32
    %c0_i32_1 = arith.constant 0 : i32
    return %c0_i32, %c0_i32_0 : i32, i32
  }
  func.func @transform_1(%arg0: i32) -> (i32, i32) {
    %c0_i32 = arith.constant 0 : i32
    %c0_i32_0 = arith.constant 0 : i32
    return %c0_i32, %arg0 : i32, i32
  }
  func.func @transform_2(%arg0: i32) -> (i32, i32) {
    %c0_i32 = arith.constant 0 : i32
    %c0_i32_0 = arith.constant 0 : i32
    %c0_i32_1 = arith.constant 0 : i32
    return %c0_i32, %c0_i32_0 : i32, i32
  }
  func.func @transform_3(%arg0: i32) -> i32 {
    %c0_i32 = arith.constant 0 : i32
    %c0_i32_0 = arith.constant 0 : i32
    return %c0_i32 : i32
  }
  func.func @transform_4(%arg0: i32) -> (i32, i32) {
    %c0_i32 = arith.constant 0 : i32
    %c0_i32_0 = arith.constant 0 : i32
    return %c0_i32, %arg0 : i32, i32
  }
}

module attributes {stable_mosaic.version = 11 : i64} {
  func.func @_gemm_epilogue_kernel(%arg0: i32, %arg1: memref<16x36xbf16, #tpu.memory_space<vmem>>, %arg2: memref<36x128xbf16, #tpu.memory_space<vmem>>, %arg3: memref<16x1xf32, #tpu.memory_space<vmem>>, %arg4: memref<2xf32, #tpu.memory_space<smem>>, %arg5: memref<16x128xf32, #tpu.memory_space<vmem>>) attributes {dimension_semantics = [#tpu.dimension_semantics<parallel>], iteration_bounds = array<i64: 1>, scalar_prefetch = 0 : i64, scratch_operands = 0 : i64, tpu.core_type = #tpu.core_type<tc>, window_params = [{pipeline_mode = #tpu.pipeline_mode<synchronous>, transform_indices = @transform_0, window_bounds = array<i64: 16, 36>}, {transform_indices = @transform_1, window_bounds = array<i64: 36, 128>}, {pipeline_mode = #tpu.pipeline_mode<synchronous>, transform_indices = @transform_2, window_bounds = array<i64: 16, 1>}, {transform_indices = @transform_3, window_bounds = array<i64: 2>}, {transform_indices = @transform_4, window_bounds = array<i64: 16, 128>}]} {
    %c0 = arith.constant 0 : index
    %c0_0 = arith.constant 0 : index
    %0 = vector.load %arg1[%c0, %c0_0] : memref<16x36xbf16, #tpu.memory_space<vmem>>, vector<16x36xbf16>
    %c0_1 = arith.constant 0 : index
    %c0_2 = arith.constant 0 : index
    %1 = vector.load %arg2[%c0_1, %c0_2] : memref<36x128xbf16, #tpu.memory_space<vmem>>, vector<36x128xbf16>
    %cst = arith.constant dense<0.000000e+00> : vector<16x128xf32>
    %2 = tpu.matmul %0, %1, %cst {dimension_numbers = #tpu.dot_dimension_numbers<[1], [0], [0], [1], [0, 0, 1, 1], [], []>} : vector<16x36xbf16>, vector<36x128xbf16>, vector<16x128xf32> -> vector<16x128xf32>
    %c0_3 = arith.constant 0 : index
    %c0_4 = arith.constant 0 : index
    %3 = vector.load %arg3[%c0_3, %c0_4] : memref<16x1xf32, #tpu.memory_space<vmem>>, vector<16x1xf32>
    %4 = vector.broadcast %3 : vector<16x1xf32> to vector<16x128xf32>
    %5 = arith.addf %2, %4 : vector<16x128xf32>
    %c0_5 = arith.constant 0 : index
    %6 = memref.load %arg4[%c0_5] : memref<2xf32, #tpu.memory_space<smem>>
    %cst_6 = arith.constant 0.000000e+00 : f32
    %7 = vector.broadcast %cst_6 : f32 to vector<16x128xf32>
    %8 = arith.cmpf oge, %5, %7 : vector<16x128xf32>
    %9 = vector.broadcast %6 : f32 to vector<16x128xf32>
    %10 = arith.mulf %9, %5 : vector<16x128xf32>
    %11 = arith.select %8, %5, %10 : vector<16x128xi1>, vector<16x128xf32>
    %c0_7 = arith.constant 0 : index
    %c0_8 = arith.constant 0 : index
    %12 = vector.load %arg5[%c0_7, %c0_8] : memref<16x128xf32, #tpu.memory_space<vmem>>, vector<16x128xf32>
    tpu.vector_store %arg5[%c0_7, %c0_8], %11 {strides = array<i32>} : memref<16x128xf32, #tpu.memory_space<vmem>>, vector<16x128xf32>,
    return
  }
  func.func @transform_0(%arg0: i32) -> (i32, i32) {
    %c0_i32 = arith.constant 0 : i32
    %c0_i32_0 = arith.constant 0 : i32
    %c0_i32_1 = arith.constant 0 : i32
    return %c0_i32, %c0_i32_0 : i32, i32
  }
  func.func @transform_1(%arg0: i32) -> (i32, i32) {
    %c0_i32 = arith.constant 0 : i32
    %c0_i32_0 = arith.constant 0 : i32
    return %c0_i32, %arg0 : i32, i32
  }
  func.func @transform_2(%arg0: i32) -> (i32, i32) {
    %c0_i32 = arith.constant 0 : i32
    %c0_i32_0 = arith.constant 0 : i32
    %c0_i32_1 = arith.constant 0 : i32
    return %c0_i32, %c0_i32_0 : i32, i32
  }
  func.func @transform_3(%arg0: i32) -> i32 {
    %c0_i32 = arith.constant 0 : i32
    %c0_i32_0 = arith.constant 0 : i32
    return %c0_i32 : i32
  }
  func.func @transform_4(%arg0: i32) -> (i32, i32) {
    %c0_i32 = arith.constant 0 : i32
    %c0_i32_0 = arith.constant 0 : i32
    return %c0_i32, %arg0 : i32, i32
  }
}

module attributes {stable_mosaic.version = 11 : i64} {
  func.func @_gemm_epilogue_res_kernel(%arg0: i32, %arg1: memref<16x36xbf16, #tpu.memory_space<vmem>>, %arg2: memref<36x128xbf16, #tpu.memory_space<vmem>>, %arg3: memref<16x1xf32, #tpu.memory_space<vmem>>, %arg4: memref<2xf32, #tpu.memory_space<smem>>, %arg5: memref<16x128xf32, #tpu.memory_space<vmem>>, %arg6: memref<16x128xf32, #tpu.memory_space<vmem>>) attributes {dimension_semantics = [#tpu.dimension_semantics<parallel>], iteration_bounds = array<i64: 1>, scalar_prefetch = 0 : i64, scratch_operands = 0 : i64, tpu.core_type = #tpu.core_type<tc>, window_params = [{pipeline_mode = #tpu.pipeline_mode<synchronous>, transform_indices = @transform_0, window_bounds = array<i64: 16, 36>}, {transform_indices = @transform_1, window_bounds = array<i64: 36, 128>}, {pipeline_mode = #tpu.pipeline_mode<synchronous>, transform_indices = @transform_2, window_bounds = array<i64: 16, 1>}, {transform_indices = @transform_3, window_bounds = array<i64: 2>}, {transform_indices = @transform_4, window_bounds = array<i64: 16, 128>}, {transform_indices = @transform_5, window_bounds = array<i64: 16, 128>}]} {
    %c0 = arith.constant 0 : index
    %c0_0 = arith.constant 0 : index
    %0 = vector.load %arg1[%c0, %c0_0] : memref<16x36xbf16, #tpu.memory_space<vmem>>, vector<16x36xbf16>
    %c0_1 = arith.constant 0 : index
    %c0_2 = arith.constant 0 : index
    %1 = vector.load %arg2[%c0_1, %c0_2] : memref<36x128xbf16, #tpu.memory_space<vmem>>, vector<36x128xbf16>
    %cst = arith.constant dense<0.000000e+00> : vector<16x128xf32>
    %2 = tpu.matmul %0, %1, %cst {dimension_numbers = #tpu.dot_dimension_numbers<[1], [0], [0], [1], [0, 0, 1, 1], [], []>} : vector<16x36xbf16>, vector<36x128xbf16>, vector<16x128xf32> -> vector<16x128xf32>
    %c0_3 = arith.constant 0 : index
    %c0_4 = arith.constant 0 : index
    %3 = vector.load %arg3[%c0_3, %c0_4] : memref<16x1xf32, #tpu.memory_space<vmem>>, vector<16x1xf32>
    %4 = vector.broadcast %3 : vector<16x1xf32> to vector<16x128xf32>
    %5 = arith.addf %2, %4 : vector<16x128xf32>
    %c0_5 = arith.constant 0 : index
    %6 = memref.load %arg4[%c0_5] : memref<2xf32, #tpu.memory_space<smem>>
    %cst_6 = arith.constant 0.000000e+00 : f32
    %7 = vector.broadcast %cst_6 : f32 to vector<16x128xf32>
    %8 = arith.cmpf oge, %5, %7 : vector<16x128xf32>
    %9 = vector.broadcast %6 : f32 to vector<16x128xf32>
    %10 = arith.mulf %9, %5 : vector<16x128xf32>
    %11 = arith.select %8, %5, %10 : vector<16x128xi1>, vector<16x128xf32>
    %c1 = arith.constant 1 : index
    %12 = memref.load %arg4[%c1] : memref<2xf32, #tpu.memory_space<smem>>
    %c0_7 = arith.constant 0 : index
    %c0_8 = arith.constant 0 : index
    %13 = vector.load %arg5[%c0_7, %c0_8] : memref<16x128xf32, #tpu.memory_space<vmem>>, vector<16x128xf32>
    %14 = vector.broadcast %12 : f32 to vector<16x128xf32>
    %15 = arith.mulf %14, %13 : vector<16x128xf32>
    %16 = arith.addf %11, %15 : vector<16x128xf32>
    %c0_9 = arith.constant 0 : index
    %c0_10 = arith.constant 0 : index
    %17 = vector.load %arg6[%c0_9, %c0_10] : memref<16x128xf32, #tpu.memory_space<vmem>>, vector<16x128xf32>
    tpu.vector_store %arg6[%c0_9, %c0_10], %16 {strides = array<i32>} : memref<16x128xf32, #tpu.memory_space<vmem>>, vector<16x128xf32>,
    return
  }
  func.func @transform_0(%arg0: i32) -> (i32, i32) {
    %c0_i32 = arith.constant 0 : i32
    %c0_i32_0 = arith.constant 0 : i32
    %c0_i32_1 = arith.constant 0 : i32
    return %c0_i32, %c0_i32_0 : i32, i32
  }
  func.func @transform_1(%arg0: i32) -> (i32, i32) {
    %c0_i32 = arith.constant 0 : i32
    %c0_i32_0 = arith.constant 0 : i32
    return %c0_i32, %arg0 : i32, i32
  }
  func.func @transform_2(%arg0: i32) -> (i32, i32) {
    %c0_i32 = arith.constant 0 : i32
    %c0_i32_0 = arith.constant 0 : i32
    %c0_i32_1 = arith.constant 0 : i32
    return %c0_i32, %c0_i32_0 : i32, i32
  }
  func.func @transform_3(%arg0: i32) -> i32 {
    %c0_i32 = arith.constant 0 : i32
    %c0_i32_0 = arith.constant 0 : i32
    return %c0_i32 : i32
  }
  func.func @transform_4(%arg0: i32) -> (i32, i32) {
    %c0_i32 = arith.constant 0 : i32
    %c0_i32_0 = arith.constant 0 : i32
    return %c0_i32, %arg0 : i32, i32
  }
  func.func @transform_5(%arg0: i32) -> (i32, i32) {
    %c0_i32 = arith.constant 0 : i32
    %c0_i32_0 = arith.constant 0 : i32
    return %c0_i32, %arg0 : i32, i32
  }
}

module attributes {stable_mosaic.version = 11 : i64} {
  func.func @_gemm_epilogue_res_kernel(%arg0: i32, %arg1: memref<4x256xbf16, #tpu.memory_space<vmem>>, %arg2: memref<256x128xbf16, #tpu.memory_space<vmem>>, %arg3: memref<4x1xf32, #tpu.memory_space<vmem>>, %arg4: memref<2xf32, #tpu.memory_space<smem>>, %arg5: memref<4x128xf32, #tpu.memory_space<vmem>>, %arg6: memref<4x128xf32, #tpu.memory_space<vmem>>) attributes {dimension_semantics = [#tpu.dimension_semantics<parallel>], iteration_bounds = array<i64: 1>, scalar_prefetch = 0 : i64, scratch_operands = 0 : i64, tpu.core_type = #tpu.core_type<tc>, window_params = [{pipeline_mode = #tpu.pipeline_mode<synchronous>, transform_indices = @transform_0, window_bounds = array<i64: 4, 256>}, {transform_indices = @transform_1, window_bounds = array<i64: 256, 128>}, {pipeline_mode = #tpu.pipeline_mode<synchronous>, transform_indices = @transform_2, window_bounds = array<i64: 4, 1>}, {transform_indices = @transform_3, window_bounds = array<i64: 2>}, {transform_indices = @transform_4, window_bounds = array<i64: 4, 128>}, {transform_indices = @transform_5, window_bounds = array<i64: 4, 128>}]} {
    %c0 = arith.constant 0 : index
    %c0_0 = arith.constant 0 : index
    %0 = vector.load %arg1[%c0, %c0_0] : memref<4x256xbf16, #tpu.memory_space<vmem>>, vector<4x256xbf16>
    %c0_1 = arith.constant 0 : index
    %c0_2 = arith.constant 0 : index
    %1 = vector.load %arg2[%c0_1, %c0_2] : memref<256x128xbf16, #tpu.memory_space<vmem>>, vector<256x128xbf16>
    %cst = arith.constant dense<0.000000e+00> : vector<4x128xf32>
    %2 = tpu.matmul %0, %1, %cst {dimension_numbers = #tpu.dot_dimension_numbers<[1], [0], [0], [1], [0, 0, 1, 1], [], []>} : vector<4x256xbf16>, vector<256x128xbf16>, vector<4x128xf32> -> vector<4x128xf32>
    %c0_3 = arith.constant 0 : index
    %c0_4 = arith.constant 0 : index
    %3 = vector.load %arg3[%c0_3, %c0_4] : memref<4x1xf32, #tpu.memory_space<vmem>>, vector<4x1xf32>
    %4 = vector.broadcast %3 : vector<4x1xf32> to vector<4x128xf32>
    %5 = arith.addf %2, %4 : vector<4x128xf32>
    %c0_5 = arith.constant 0 : index
    %6 = memref.load %arg4[%c0_5] : memref<2xf32, #tpu.memory_space<smem>>
    %cst_6 = arith.constant 0.000000e+00 : f32
    %7 = vector.broadcast %cst_6 : f32 to vector<4x128xf32>
    %8 = arith.cmpf oge, %5, %7 : vector<4x128xf32>
    %9 = vector.broadcast %6 : f32 to vector<4x128xf32>
    %10 = arith.mulf %9, %5 : vector<4x128xf32>
    %11 = arith.select %8, %5, %10 : vector<4x128xi1>, vector<4x128xf32>
    %c1 = arith.constant 1 : index
    %12 = memref.load %arg4[%c1] : memref<2xf32, #tpu.memory_space<smem>>
    %c0_7 = arith.constant 0 : index
    %c0_8 = arith.constant 0 : index
    %13 = vector.load %arg5[%c0_7, %c0_8] : memref<4x128xf32, #tpu.memory_space<vmem>>, vector<4x128xf32>
    %14 = vector.broadcast %12 : f32 to vector<4x128xf32>
    %15 = arith.mulf %14, %13 : vector<4x128xf32>
    %16 = arith.addf %11, %15 : vector<4x128xf32>
    %c0_9 = arith.constant 0 : index
    %c0_10 = arith.constant 0 : index
    %17 = vector.load %arg6[%c0_9, %c0_10] : memref<4x128xf32, #tpu.memory_space<vmem>>, vector<4x128xf32>
    tpu.vector_store %arg6[%c0_9, %c0_10], %16 {strides = array<i32>} : memref<4x128xf32, #tpu.memory_space<vmem>>, vector<4x128xf32>,
    return
  }
  func.func @transform_0(%arg0: i32) -> (i32, i32) {
    %c0_i32 = arith.constant 0 : i32
    %c0_i32_0 = arith.constant 0 : i32
    %c0_i32_1 = arith.constant 0 : i32
    return %c0_i32, %c0_i32_0 : i32, i32
  }
  func.func @transform_1(%arg0: i32) -> (i32, i32) {
    %c0_i32 = arith.constant 0 : i32
    %c0_i32_0 = arith.constant 0 : i32
    return %c0_i32, %arg0 : i32, i32
  }
  func.func @transform_2(%arg0: i32) -> (i32, i32) {
    %c0_i32 = arith.constant 0 : i32
    %c0_i32_0 = arith.constant 0 : i32
    %c0_i32_1 = arith.constant 0 : i32
    return %c0_i32, %c0_i32_0 : i32, i32
  }
  func.func @transform_3(%arg0: i32) -> i32 {
    %c0_i32 = arith.constant 0 : i32
    %c0_i32_0 = arith.constant 0 : i32
    return %c0_i32 : i32
  }
  func.func @transform_4(%arg0: i32) -> (i32, i32) {
    %c0_i32 = arith.constant 0 : i32
    %c0_i32_0 = arith.constant 0 : i32
    return %c0_i32, %arg0 : i32, i32
  }
  func.func @transform_5(%arg0: i32) -> (i32, i32) {
    %c0_i32 = arith.constant 0 : i32
    %c0_i32_0 = arith.constant 0 : i32
    return %c0_i32, %arg0 : i32, i32
  }
}

</mosaic_0001>

<llo_original>
// kernel: down_block_pix_forward.4
$region0: #{down_block_pix_forward.4}
  #allocation0 [shape = 'u32[]', space=smem, size = 0x4, offset = 0x4, fixed_abs, tag = 'smem constant byte address 0x4 - core index']
  #allocation1 [shape = 'u32[144,128]{1,0:T(1,128)}', space=vmem, size = 0x12000, scoped, tag = 'internal scratch']
  %s0 = inlined_call_operand.vmem [shape: bf16[4,256], index: 0, kind: input, shape index: {}]
  %s1 = inlined_call_operand.vmem [shape: bf16[256,128], index: 1, kind: input, shape index: {}]
  %s2 = inlined_call_operand.vmem [shape: f32[4,1], index: 2, kind: input, shape index: {}]
  %s3 = inlined_call_operand.vmem [shape: f32[2], index: 3, kind: input, shape index: {}]
  %s4 = inlined_call_operand.vmem [shape: f32[4,128], index: 4, kind: output, shape index: {}]
  %s5 = sld [smem:[#allocation0]]
  $region30: #{down_block_pix_forward.4} parent=0
    _
  %s7 = ssub.s32 1, %s5
  %s8 = scalar_select 0, %s7, %s5
  $region1: #{down_block_pix_forward.4} parent=0
    #allocation2 [shape = 'u8[512]{0}', space=smem, size = 0x200, scoped, tag = 'input window, operand 3, single buffered']
    #allocation3 [shape = 's32[1]{0}', space=sflag, size = 0x4, scoped, tag = 'scoped memory for down_block_pix_forward.4']
    %9 = vsyncpa [#allocation3], 0
    // Predicated region
    $region2: #{down_block_pix_forward.4} parent=1 // pred_check
      _
    $region3: #{down_block_pix_forward.4} parent=1 // pred_check_branch
      %11 = sbr.rel (0) target = $region5
    $region4: #{down_block_pix_forward.4} parent=1 // pred_region
      _
    $region5: #{down_block_pix_forward.4} parent=1 // pred_fallthru
      _
    // Predicated region
    $region6: #{down_block_pix_forward.4} parent=1 // pred_check
      _
    $region7: #{down_block_pix_forward.4} parent=1 // pred_check_branch
      %13 = sbr.rel (0) target = $region9
    $region8: #{down_block_pix_forward.4} parent=1 // pred_region
      _
    $region9: #{down_block_pix_forward.4} parent=1 // pred_fallthru
      _
    // Predicated region
    $region10: #{down_block_pix_forward.4} parent=1 // pred_check
      _
    $region11: #{down_block_pix_forward.4} parent=1 // pred_check_branch
      %15 = sbr.rel (0) target = $region13
    $region12: #{down_block_pix_forward.4} parent=1 // pred_region
      _
    $region13: #{down_block_pix_forward.4} parent=1 // pred_fallthru
      _
    // Predicated region
    $region14: #{down_block_pix_forward.4} parent=1 // pred_check
      _
    $region15: #{down_block_pix_forward.4} parent=1 // pred_check_branch
      %17 = sbr.rel (0) target = $region17
    $region16: #{down_block_pix_forward.4} parent=1 // pred_region
      %s19 = ssub.s32 16, 16
      %20 = vsyncadd [#allocation3], %s19
      %s22 = sshll.u32 %s3, 4
      %s23 = int_to_ptr.vmem [resolvable:$true] %s22
      %25 = dma.vmem_to_smem %s23, 16, [#allocation2], [#allocation3]
    $region17: #{down_block_pix_forward.4} parent=1 // pred_fallthru
      _
    // Predicated region
    $region18: #{down_block_pix_forward.4} parent=1 // pred_check
      _
    $region19: #{down_block_pix_forward.4} parent=1 // pred_check_branch
      %27 = sbr.rel (0) target = $region21
    $region20: #{down_block_pix_forward.4} parent=1 // pred_region
      %28 = dma.done [#allocation3], 16
    $region21: #{down_block_pix_forward.4} parent=1 // pred_fallthru
      _
    %29 = sfence
    %v31 = vld [vmem:[%s0] sm:$0xf]
    %v32 = vld [vmem:[%s1] sm:$0xf]
    %v33 = vld [vmem:[%s1 + $0x4] sm:$0xf]
    %v34 = vld [vmem:[%s1 + $0x8] sm:$0xf]
    %v35 = vld [vmem:[%s1 + $0xc] sm:$0xf]
    %v36 = vld [vmem:[%s1 + $0x10] sm:$0xf]
    %v37 = vld [vmem:[%s1 + $0x14] sm:$0xf]
    %v38 = vld [vmem:[%s1 + $0x18] sm:$0xf]
    %v39 = vld [vmem:[%s1 + $0x1c] sm:$0xf]
    %v40 = vld [vmem:[%s1 + $0x20] sm:$0xf]
    %v41 = vld [vmem:[%s1 + $0x24] sm:$0xf]
    %v42 = vld [vmem:[%s1 + $0x28] sm:$0xf]
    %v43 = vld [vmem:[%s1 + $0x2c] sm:$0xf]
    %v44 = vld [vmem:[%s1 + $0x30] sm:$0xf]
    %v45 = vld [vmem:[%s1 + $0x34] sm:$0xf]
    %v46 = vld [vmem:[%s1 + $0x38] sm:$0xf]
    %v47 = vld [vmem:[%s1 + $0x3c] sm:$0xf]
    %v48 = vld [vmem:[%s1 + $0x40] sm:$0xf]
    %v49 = vld [vmem:[%s1 + $0x44] sm:$0xf]
    %v50 = vld [vmem:[%s1 + $0x48] sm:$0xf]
    %v51 = vld [vmem:[%s1 + $0x4c] sm:$0xf]
    %v52 = vld [vmem:[%s1 + $0x50] sm:$0xf]
    %v53 = vld [vmem:[%s1 + $0x54] sm:$0xf]
    %v54 = vld [vmem:[%s1 + $0x58] sm:$0xf]
    %v55 = vld [vmem:[%s1 + $0x5c] sm:$0xf]
    %v56 = vld [vmem:[%s1 + $0x60] sm:$0xf]
    %v57 = vld [vmem:[%s1 + $0x64] sm:$0xf]
    %v58 = vld [vmem:[%s1 + $0x68] sm:$0xf]
    %v59 = vld [vmem:[%s1 + $0x6c] sm:$0xf]
    %v60 = vld [vmem:[%s1 + $0x70] sm:$0xf]
    %v61 = vld [vmem:[%s1 + $0x74] sm:$0xf]
    %v62 = vld [vmem:[%s1 + $0x78] sm:$0xf]
    %v63 = vld [vmem:[%s1 + $0x7c] sm:$0xf]
    %v64 = vld [vmem:[%s2] sm:$0xf]
    %66 = vset.pattern.permute.xlu0 0
    %67 = vperm.xlu0 %66, %v64
    %v68 = vpop.permute.xlu0 %67
    %v72 = vunpack.c.l.s4 1983009808
    %v73 = vunpack.c.0.s8 %v72
    %v74 = vlaneseq
    %v75 = vshrl.u32 %v74, 7
    %v76 = vsub.s32 %v73, %v75
    %v77 = vrot.slane %v31, %v76
    %v78 = vcombine.high %v77, %v77
    %v113 = vunpack.c.l.b16 %v32
    %v114 = vunpack.c.l.b16 %v33
    %v115 = vunpack.c.l.b16 %v34
    %v116 = vunpack.c.l.b16 %v35
    %v117 = vunpack.c.l.b16 %v36
    %v118 = vunpack.c.l.b16 %v37
    %v119 = vunpack.c.l.b16 %v38
    %v120 = vunpack.c.l.b16 %v39
    %v121 = vunpack.c.l.b16 %v40
    %v122 = vunpack.c.l.b16 %v41
    %v123 = vunpack.c.l.b16 %v42
    %v124 = vunpack.c.l.b16 %v43
    %v125 = vunpack.c.l.b16 %v44
    %v126 = vunpack.c.l.b16 %v45
    %v127 = vunpack.c.l.b16 %v46
    %v128 = vunpack.c.l.b16 %v47
    %v129 = vunpack.c.l.b16 %v48
    %v130 = vunpack.c.l.b16 %v49
    %v131 = vunpack.c.l.b16 %v50
    %v132 = vunpack.c.l.b16 %v51
    %v133 = vunpack.c.l.b16 %v52
    %v134 = vunpack.c.l.b16 %v53
    %v135 = vunpack.c.l.b16 %v54
    %v136 = vunpack.c.l.b16 %v55
    %v137 = vunpack.c.l.b16 %v56
    %v138 = vunpack.c.l.b16 %v57
    %v139 = vunpack.c.l.b16 %v58
    %v140 = vunpack.c.l.b16 %v59
    %v141 = vunpack.c.l.b16 %v60
    %v142 = vunpack.c.l.b16 %v61
    %v143 = vunpack.c.l.b16 %v62
    %v144 = vunpack.c.l.b16 %v63
    %v145 = vpack.c.b16 %v114, %v113
    %v146 = vpack.c.b16 %v116, %v115
    %v147 = vpack.c.b16 %v118, %v117
    %v148 = vpack.c.b16 %v120, %v119
    %v149 = vpack.c.b16 %v122, %v121
    %v150 = vpack.c.b16 %v124, %v123
    %v151 = vpack.c.b16 %v126, %v125
    %v152 = vpack.c.b16 %v128, %v127
    %v153 = vpack.c.b16 %v130, %v129
    %v154 = vpack.c.b16 %v132, %v131
    %v155 = vpack.c.b16 %v134, %v133
    %v156 = vpack.c.b16 %v136, %v135
    %v157 = vpack.c.b16 %v138, %v137
    %v158 = vpack.c.b16 %v140, %v139
    %v159 = vpack.c.b16 %v142, %v141
    %v160 = vpack.c.b16 %v144, %v143
    %177 = vmatprep.subr.bf16.mxu0 0
    %178 = vmatpush1.bf16.msra.mxu0 %v152
    %179 = vmatprep.subr.bf16.mxu0 0
    %180 = vmatpush1.bf16.msra.mxu0 %v151
    %181 = vmatprep.subr.bf16.mxu0 0
    %182 = vmatpush1.bf16.msra.mxu0 %v150
    %183 = vmatprep.subr.bf16.mxu0 0
    %184 = vmatpush1.bf16.msra.mxu0 %v149
    %185 = vmatprep.subr.bf16.mxu0 0
    %186 = vmatpush1.bf16.msra.mxu0 %v148
    %187 = vmatprep.subr.bf16.mxu0 0
    %188 = vmatpush1.bf16.msra.mxu0 %v147
    %189 = vmatprep.subr.bf16.mxu0 0
    %190 = vmatpush1.bf16.msra.mxu0 %v146
    %191 = vmatprep.subr.bf16.mxu0 0
    %192 = vmatpush1.bf16.msra.mxu0 %v145
    %193 = vmatprep.subr.bf16.mxu0 0
    %194 = vmatpush2.bf16.msra.mxu0 %v160
    %195 = vmatprep.subr.bf16.mxu0 0
    %196 = vmatpush2.bf16.msra.mxu0 %v159
    %197 = vmatprep.subr.bf16.mxu0 0
    %198 = vmatpush2.bf16.msra.mxu0 %v158
    %199 = vmatprep.subr.bf16.mxu0 0
    %200 = vmatpush2.bf16.msra.mxu0 %v157
    %201 = vmatprep.subr.bf16.mxu0 0
    %202 = vmatpush2.bf16.msra.mxu0 %v156
    %203 = vmatprep.subr.bf16.mxu0 0
    %204 = vmatpush2.bf16.msra.mxu0 %v155
    %205 = vmatprep.subr.bf16.mxu0 0
    %206 = vmatpush2.bf16.msra.mxu0 %v154
    %207 = vmatprep.subr.bf16.mxu0 0
    %208 = vmatpush2.bf16.msra.mxu0 %v153
    %209 = vmatprep.mubr.bf16.mxu0 %v78
    %210 = vmatmul.mubr.bf16.gmra.mxu0 %v77
    %v211 = vpop.f32.mrf.mxu0
    %v212 = vadd.f32 %v68, %v211
    %v213 = vpop.f32.mrf.mxu0
    %v214 = vpop.f32.mrf.mxu0
    %v215 = vpop.f32.mrf.mxu0
    %216 = vdwg.mxu0
    %s217 = sld [smem:[#allocation2]]
    %vm218 = vcmp.ge.f32.partialorder %v212, 0.0
    %v219 = vstv %s217
    %v220 = vmul.f32 %v219, %v212
    %v221 = vsel %vm218, %v212, %v220
    %222 = vst [vmem:[%s4] sm:$0xf] %v221
    // Predicated region
    $region22: #{down_block_pix_forward.4} parent=1 // pred_check
      _
    $region23: #{down_block_pix_forward.4} parent=1 // pred_check_branch
      %224 = sbr.rel (0) target = $region25
    $region24: #{down_block_pix_forward.4} parent=1 // pred_region
      _
    $region25: #{down_block_pix_forward.4} parent=1 // pred_fallthru
      _
    // Predicated region
    $region26: #{down_block_pix_forward.4} parent=1 // pred_check
      _
    $region27: #{down_block_pix_forward.4} parent=1 // pred_check_branch
      %226 = sbr.rel (0) target = $region29
    $region28: #{down_block_pix_forward.4} parent=1 // pred_region
      _
    $region29: #{down_block_pix_forward.4} parent=1 // pred_fallthru
      _
    %227 = vsyncpa [#allocation3], 1

// kernel: down_block_pix_forward.5
$region0: #{down_block_pix_forward.5}
  #allocation0 [shape = 'u32[]', space=smem, size = 0x4, offset = 0x4, fixed_abs, tag = 'smem constant byte address 0x4 - core index']
  #allocation1 [shape = 'u32[144,128]{1,0:T(1,128)}', space=vmem, size = 0x12000, scoped, tag = 'internal scratch']
  %s0 = inlined_call_operand.vmem [shape: bf16[16,36], index: 0, kind: input, shape index: {}]
  %s1 = inlined_call_operand.vmem [shape: bf16[36,128], index: 1, kind: input, shape index: {}]
  %s2 = inlined_call_operand.vmem [shape: f32[16,1], index: 2, kind: input, shape index: {}]
  %s3 = inlined_call_operand.vmem [shape: f32[2], index: 3, kind: input, shape index: {}]
  %s4 = inlined_call_operand.vmem [shape: f32[16,128], index: 4, kind: output, shape index: {}]
  %s5 = sld [smem:[#allocation0]]
  $region30: #{down_block_pix_forward.5} parent=0
    _
  %s7 = ssub.s32 1, %s5
  %s8 = scalar_select 0, %s7, %s5
  $region1: #{down_block_pix_forward.5} parent=0
    #allocation2 [shape = 'u8[512]{0}', space=smem, size = 0x200, scoped, tag = 'input window, operand 3, single buffered']
    #allocation3 [shape = 's32[1]{0}', space=sflag, size = 0x4, scoped, tag = 'scoped memory for down_block_pix_forward.5']
    %9 = vsyncpa [#allocation3], 0
    // Predicated region
    $region2: #{down_block_pix_forward.5} parent=1 // pred_check
      _
    $region3: #{down_block_pix_forward.5} parent=1 // pred_check_branch
      %11 = sbr.rel (0) target = $region5
    $region4: #{down_block_pix_forward.5} parent=1 // pred_region
      _
    $region5: #{down_block_pix_forward.5} parent=1 // pred_fallthru
      _
    // Predicated region
    $region6: #{down_block_pix_forward.5} parent=1 // pred_check
      _
    $region7: #{down_block_pix_forward.5} parent=1 // pred_check_branch
      %13 = sbr.rel (0) target = $region9
    $region8: #{down_block_pix_forward.5} parent=1 // pred_region
      _
    $region9: #{down_block_pix_forward.5} parent=1 // pred_fallthru
      _
    // Predicated region
    $region10: #{down_block_pix_forward.5} parent=1 // pred_check
      _
    $region11: #{down_block_pix_forward.5} parent=1 // pred_check_branch
      %15 = sbr.rel (0) target = $region13
    $region12: #{down_block_pix_forward.5} parent=1 // pred_region
      _
    $region13: #{down_block_pix_forward.5} parent=1 // pred_fallthru
      _
    // Predicated region
    $region14: #{down_block_pix_forward.5} parent=1 // pred_check
      _
    $region15: #{down_block_pix_forward.5} parent=1 // pred_check_branch
      %17 = sbr.rel (0) target = $region17
    $region16: #{down_block_pix_forward.5} parent=1 // pred_region
      %s19 = ssub.s32 16, 16
      %20 = vsyncadd [#allocation3], %s19
      %s22 = sshll.u32 %s3, 4
      %s23 = int_to_ptr.vmem [resolvable:$true] %s22
      %25 = dma.vmem_to_smem %s23, 16, [#allocation2], [#allocation3]
    $region17: #{down_block_pix_forward.5} parent=1 // pred_fallthru
      _
    // Predicated region
    $region18: #{down_block_pix_forward.5} parent=1 // pred_check
      _
    $region19: #{down_block_pix_forward.5} parent=1 // pred_check_branch
      %27 = sbr.rel (0) target = $region21
    $region20: #{down_block_pix_forward.5} parent=1 // pred_region
      %28 = dma.done [#allocation3], 16
    $region21: #{down_block_pix_forward.5} parent=1 // pred_fallthru
      _
    %29 = sfence
    %v31 = vld [vmem:[%s0] sm:$0xf]
    %v32 = vld [vmem:[%s0 + $0x4] sm:$0xf]
    %v33 = vld [vmem:[%s1] sm:$0xf]
    %v34 = vld [vmem:[%s1 + $0x4] sm:$0xf]
    %v35 = vld [vmem:[%s1 + $0x8] sm:$0xf]
    %v36 = vld [vmem:[%s1 + $0xc] sm:$0xf]
    %v37 = vld [vmem:[%s1 + $0x10] sm:$0x3]
    %v38 = vld [vmem:[%s2] sm:$0xff]
    %v39 = vld [vmem:[%s2 + $0x8] sm:$0xff]
    %41 = vset.pattern.permute.xlu0 0
    %42 = vperm.xlu0 %41, %v38
    %v43 = vpop.permute.xlu0 %42
    %46 = vset.pattern.permute.xlu0 0
    %47 = vperm.xlu0 %46, %v39
    %v48 = vpop.permute.xlu0 %47
    %v52 = vunpack.c.l.b16 %v31
    %v53 = vunpack.c.l.b16 %v32
    %v54 = vpack.c.b16 %v53, %v52
    %v60 = vunpack.c.l.b16 %v33
    %v61 = vunpack.c.l.b16 %v34
    %v62 = vunpack.c.l.b16 %v35
    %v63 = vunpack.c.l.b16 %v36
    %v64 = vunpack.c.l.b16 %v37
    %v65 = vpack.c.b16 %v61, %v60
    %v66 = vpack.c.b16 %v63, %v62
    %v67 = vpack.c.b16 %v64, %v64
    %vm70 = vcmask 293888
    %v72 = vsel %vm70, %v54, 0
    %vm74 = vcmask 1041408
    %v76 = vsel %vm74, %v67, 0
    %78 = vmatprep.subr.bf16.mxu0 0
    %79 = vmatpush1.bf16.msra.mxu0 0
    %80 = vmatprep.subr.bf16.mxu0 0
    %81 = vmatpush1.bf16.msra.mxu0 0
    %82 = vmatprep.subr.bf16.mxu0 0
    %83 = vmatpush1.bf16.msra.mxu0 0
    %84 = vmatprep.subr.bf16.mxu0 0
    %85 = vmatpush1.bf16.msra.mxu0 0
    %86 = vmatprep.subr.bf16.mxu0 0
    %87 = vmatpush1.bf16.msra.mxu0 0
    %88 = vmatprep.subr.bf16.mxu0 0
    %89 = vmatpush1.bf16.msra.mxu0 %v76
    %90 = vmatprep.subr.bf16.mxu0 0
    %91 = vmatpush1.bf16.msra.mxu0 %v66
    %92 = vmatprep.subr.bf16.mxu0 0
    %93 = vmatpush1.bf16.msra.mxu0 %v65
    %94 = vmatprep.subr.bf16.mxu0 0
    %95 = vmatpush2.bf16.msra.mxu0 0
    %96 = vmatprep.subr.bf16.mxu0 0
    %97 = vmatpush2.bf16.msra.mxu0 0
    %98 = vmatprep.subr.bf16.mxu0 0
    %99 = vmatpush2.bf16.msra.mxu0 0
    %100 = vmatprep.subr.bf16.mxu0 0
    %101 = vmatpush2.bf16.msra.mxu0 0
    %102 = vmatprep.subr.bf16.mxu0 0
    %103 = vmatpush2.bf16.msra.mxu0 0
    %104 = vmatprep.subr.bf16.mxu0 0
    %105 = vmatpush2.bf16.msra.mxu0 0
    %106 = vmatprep.subr.bf16.mxu0 0
    %107 = vmatpush2.bf16.msra.mxu0 0
    %108 = vmatprep.subr.bf16.mxu0 0
    %109 = vmatpush2.bf16.msra.mxu0 0
    %110 = vmatprep.mubr.bf16.mxu0 0
    %111 = vmatmul.mubr.bf16.gmra.mxu0 %v72
    %v112 = vpop.f32.mrf.mxu0
    %v113 = vadd.f32 %v43, %v112
    %v114 = vpop.f32.mrf.mxu0
    %v115 = vpop.f32.mrf.mxu0
    %v116 = vadd.f32 %v48, %v115
    %v117 = vpop.f32.mrf.mxu0
    %118 = vdwg.mxu0
    %s119 = sld [smem:[#allocation2]]
    %vm120 = vcmp.ge.f32.partialorder %v113, 0.0
    %vm121 = vcmp.ge.f32.partialorder %v116, 0.0
    %v122 = vstv %s119
    %v123 = vmul.f32 %v122, %v113
    %v124 = vmul.f32 %v122, %v116
    %v125 = vsel %vm120, %v113, %v123
    %v126 = vsel %vm121, %v116, %v124
    %127 = vst [vmem:[%s4] sm:$0xff] %v125
    %128 = vst [vmem:[%s4 + $0x8] sm:$0xff] %v126
    // Predicated region
    $region22: #{down_block_pix_forward.5} parent=1 // pred_check
      _
    $region23: #{down_block_pix_forward.5} parent=1 // pred_check_branch
      %130 = sbr.rel (0) target = $region25
    $region24: #{down_block_pix_forward.5} parent=1 // pred_region
      _
    $region25: #{down_block_pix_forward.5} parent=1 // pred_fallthru
      _
    // Predicated region
    $region26: #{down_block_pix_forward.5} parent=1 // pred_check
      _
    $region27: #{down_block_pix_forward.5} parent=1 // pred_check_branch
      %132 = sbr.rel (0) target = $region29
    $region28: #{down_block_pix_forward.5} parent=1 // pred_region
      _
    $region29: #{down_block_pix_forward.5} parent=1 // pred_fallthru
      _
    %133 = vsyncpa [#allocation3], 1

// kernel: down_block_pix_forward.6
$region0: #{down_block_pix_forward.6}
  #allocation0 [shape = 'u32[]', space=smem, size = 0x4, offset = 0x4, fixed_abs, tag = 'smem constant byte address 0x4 - core index']
  #allocation1 [shape = 'u32[144,128]{1,0:T(1,128)}', space=vmem, size = 0x12000, scoped, tag = 'internal scratch']
  %s0 = inlined_call_operand.vmem [shape: bf16[16,36], index: 0, kind: input, shape index: {}]
  %s1 = inlined_call_operand.vmem [shape: bf16[36,128], index: 1, kind: input, shape index: {}]
  %s2 = inlined_call_operand.vmem [shape: f32[16,1], index: 2, kind: input, shape index: {}]
  %s3 = inlined_call_operand.vmem [shape: f32[2], index: 3, kind: input, shape index: {}]
  %s4 = inlined_call_operand.vmem [shape: f32[16,128], index: 4, kind: input, shape index: {}]
  %s5 = inlined_call_operand.vmem [shape: f32[16,128], index: 5, kind: output, shape index: {}]
  %s6 = sld [smem:[#allocation0]]
  $region34: #{down_block_pix_forward.6} parent=0
    _
  %s8 = ssub.s32 1, %s6
  %s9 = scalar_select 0, %s8, %s6
  $region1: #{down_block_pix_forward.6} parent=0
    #allocation2 [shape = 'u8[512]{0}', space=smem, size = 0x200, scoped, tag = 'input window, operand 3, single buffered']
    #allocation3 [shape = 's32[1]{0}', space=sflag, size = 0x4, scoped, tag = 'scoped memory for down_block_pix_forward.6']
    %10 = vsyncpa [#allocation3], 0
    // Predicated region
    $region2: #{down_block_pix_forward.6} parent=1 // pred_check
      _
    $region3: #{down_block_pix_forward.6} parent=1 // pred_check_branch
      %12 = sbr.rel (0) target = $region5
    $region4: #{down_block_pix_forward.6} parent=1 // pred_region
      _
    $region5: #{down_block_pix_forward.6} parent=1 // pred_fallthru
      _
    // Predicated region
    $region6: #{down_block_pix_forward.6} parent=1 // pred_check
      _
    $region7: #{down_block_pix_forward.6} parent=1 // pred_check_branch
      %14 = sbr.rel (0) target = $region9
    $region8: #{down_block_pix_forward.6} parent=1 // pred_region
      _
    $region9: #{down_block_pix_forward.6} parent=1 // pred_fallthru
      _
    // Predicated region
    $region10: #{down_block_pix_forward.6} parent=1 // pred_check
      _
    $region11: #{down_block_pix_forward.6} parent=1 // pred_check_branch
      %16 = sbr.rel (0) target = $region13
    $region12: #{down_block_pix_forward.6} parent=1 // pred_region
      _
    $region13: #{down_block_pix_forward.6} parent=1 // pred_fallthru
      _
    // Predicated region
    $region14: #{down_block_pix_forward.6} parent=1 // pred_check
      _
    $region15: #{down_block_pix_forward.6} parent=1 // pred_check_branch
      %18 = sbr.rel (0) target = $region17
    $region16: #{down_block_pix_forward.6} parent=1 // pred_region
      %s20 = ssub.s32 16, 16
      %21 = vsyncadd [#allocation3], %s20
      %s23 = sshll.u32 %s3, 4
      %s24 = int_to_ptr.vmem [resolvable:$true] %s23
      %26 = dma.vmem_to_smem %s24, 16, [#allocation2], [#allocation3]
    $region17: #{down_block_pix_forward.6} parent=1 // pred_fallthru
      _
    // Predicated region
    $region18: #{down_block_pix_forward.6} parent=1 // pred_check
      _
    $region19: #{down_block_pix_forward.6} parent=1 // pred_check_branch
      %28 = sbr.rel (0) target = $region21
    $region20: #{down_block_pix_forward.6} parent=1 // pred_region
      _
    $region21: #{down_block_pix_forward.6} parent=1 // pred_fallthru
      _
    // Predicated region
    $region22: #{down_block_pix_forward.6} parent=1 // pred_check
      _
    $region23: #{down_block_pix_forward.6} parent=1 // pred_check_branch
      %30 = sbr.rel (0) target = $region25
    $region24: #{down_block_pix_forward.6} parent=1 // pred_region
      %31 = dma.done [#allocation3], 16
    $region25: #{down_block_pix_forward.6} parent=1 // pred_fallthru
      _
    %32 = sfence
    %v34 = vld [vmem:[%s0] sm:$0xf]
    %v35 = vld [vmem:[%s0 + $0x4] sm:$0xf]
    %v36 = vld [vmem:[%s1] sm:$0xf]
    %v37 = vld [vmem:[%s1 + $0x4] sm:$0xf]
    %v38 = vld [vmem:[%s1 + $0x8] sm:$0xf]
    %v39 = vld [vmem:[%s1 + $0xc] sm:$0xf]
    %v40 = vld [vmem:[%s1 + $0x10] sm:$0x3]
    %v41 = vld [vmem:[%s2] sm:$0xff]
    %v42 = vld [vmem:[%s2 + $0x8] sm:$0xff]
    %44 = vset.pattern.permute.xlu0 0
    %45 = vperm.xlu0 %44, %v41
    %v46 = vpop.permute.xlu0 %45
    %49 = vset.pattern.permute.xlu0 0
    %50 = vperm.xlu0 %49, %v42
    %v51 = vpop.permute.xlu0 %50
    %v55 = vunpack.c.l.b16 %v34
    %v56 = vunpack.c.l.b16 %v35
    %v57 = vpack.c.b16 %v56, %v55
    %v63 = vunpack.c.l.b16 %v36
    %v64 = vunpack.c.l.b16 %v37
    %v65 = vunpack.c.l.b16 %v38
    %v66 = vunpack.c.l.b16 %v39
    %v67 = vunpack.c.l.b16 %v40
    %v68 = vpack.c.b16 %v64, %v63
    %v69 = vpack.c.b16 %v66, %v65
    %v70 = vpack.c.b16 %v67, %v67
    %vm73 = vcmask 293888
    %v75 = vsel %vm73, %v57, 0
    %vm77 = vcmask 1041408
    %v79 = vsel %vm77, %v70, 0
    %81 = vmatprep.subr.bf16.mxu0 0
    %82 = vmatpush1.bf16.msra.mxu0 0
    %83 = vmatprep.subr.bf16.mxu0 0
    %84 = vmatpush1.bf16.msra.mxu0 0
    %85 = vmatprep.subr.bf16.mxu0 0
    %86 = vmatpush1.bf16.msra.mxu0 0
    %87 = vmatprep.subr.bf16.mxu0 0
    %88 = vmatpush1.bf16.msra.mxu0 0
    %89 = vmatprep.subr.bf16.mxu0 0
    %90 = vmatpush1.bf16.msra.mxu0 0
    %91 = vmatprep.subr.bf16.mxu0 0
    %92 = vmatpush1.bf16.msra.mxu0 %v79
    %93 = vmatprep.subr.bf16.mxu0 0
    %94 = vmatpush1.bf16.msra.mxu0 %v69
    %95 = vmatprep.subr.bf16.mxu0 0
    %96 = vmatpush1.bf16.msra.mxu0 %v68
    %97 = vmatprep.subr.bf16.mxu0 0
    %98 = vmatpush2.bf16.msra.mxu0 0
    %99 = vmatprep.subr.bf16.mxu0 0
    %100 = vmatpush2.bf16.msra.mxu0 0
    %101 = vmatprep.subr.bf16.mxu0 0
    %102 = vmatpush2.bf16.msra.mxu0 0
    %103 = vmatprep.subr.bf16.mxu0 0
    %104 = vmatpush2.bf16.msra.mxu0 0
    %105 = vmatprep.subr.bf16.mxu0 0
    %106 = vmatpush2.bf16.msra.mxu0 0
    %107 = vmatprep.subr.bf16.mxu0 0
    %108 = vmatpush2.bf16.msra.mxu0 0
    %109 = vmatprep.subr.bf16.mxu0 0
    %110 = vmatpush2.bf16.msra.mxu0 0
    %111 = vmatprep.subr.bf16.mxu0 0
    %112 = vmatpush2.bf16.msra.mxu0 0
    %113 = vmatprep.mubr.bf16.mxu0 0
    %114 = vmatmul.mubr.bf16.gmra.mxu0 %v75
    %v115 = vpop.f32.mrf.mxu0
    %v116 = vadd.f32 %v46, %v115
    %v117 = vpop.f32.mrf.mxu0
    %v118 = vpop.f32.mrf.mxu0
    %v119 = vadd.f32 %v51, %v118
    %v120 = vpop.f32.mrf.mxu0
    %121 = vdwg.mxu0
    %s122 = sld [smem:[#allocation2]]
    %vm123 = vcmp.ge.f32.partialorder %v116, 0.0
    %vm124 = vcmp.ge.f32.partialorder %v119, 0.0
    %v125 = vstv %s122
    %v126 = vmul.f32 %v125, %v116
    %v127 = vmul.f32 %v125, %v119
    %v128 = vsel %vm123, %v116, %v126
    %v129 = vsel %vm124, %v119, %v127
    %s130 = sld [smem:[#allocation2 + $0x1]]
    %v131 = vld [vmem:[%s4] sm:$0xff]
    %v132 = vld [vmem:[%s4 + $0x8] sm:$0xff]
    %v133 = vstv %s130
    %v134 = vmul.f32 %v133, %v131
    %v135 = vmul.f32 %v133, %v132
    %v136 = vadd.f32 %v128, %v134
    %v137 = vadd.f32 %v129, %v135
    %138 = vst [vmem:[%s5] sm:$0xff] %v136
    %139 = vst [vmem:[%s5 + $0x8] sm:$0xff] %v137
    // Predicated region
    $region26: #{down_block_pix_forward.6} parent=1 // pred_check
      _
    $region27: #{down_block_pix_forward.6} parent=1 // pred_check_branch
      %141 = sbr.rel (0) target = $region29
    $region28: #{down_block_pix_forward.6} parent=1 // pred_region
      _
    $region29: #{down_block_pix_forward.6} parent=1 // pred_fallthru
      _
    // Predicated region
    $region30: #{down_block_pix_forward.6} parent=1 // pred_check
      _
    $region31: #{down_block_pix_forward.6} parent=1 // pred_check_branch
      %143 = sbr.rel (0) target = $region33
    $region32: #{down_block_pix_forward.6} parent=1 // pred_region
      _
    $region33: #{down_block_pix_forward.6} parent=1 // pred_fallthru
      _
    %144 = vsyncpa [#allocation3], 1

// kernel: down_block_pix_forward.7
$region0: #{down_block_pix_forward.7}
  #allocation0 [shape = 'u32[]', space=smem, size = 0x4, offset = 0x4, fixed_abs, tag = 'smem constant byte address 0x4 - core index']
  #allocation1 [shape = 'u32[144,128]{1,0:T(1,128)}', space=vmem, size = 0x12000, scoped, tag = 'internal scratch']
  %s0 = inlined_call_operand.vmem [shape: bf16[4,256], index: 0, kind: input, shape index: {}]
  %s1 = inlined_call_operand.vmem [shape: bf16[256,128], index: 1, kind: input, shape index: {}]
  %s2 = inlined_call_operand.vmem [shape: f32[4,1], index: 2, kind: input, shape index: {}]
  %s3 = inlined_call_operand.vmem [shape: f32[2], index: 3, kind: input, shape index: {}]
  %s4 = inlined_call_operand.vmem [shape: f32[4,128], index: 4, kind: input, shape index: {}]
  %s5 = inlined_call_operand.vmem [shape: f32[4,128], index: 5, kind: output, shape index: {}]
  %s6 = sld [smem:[#allocation0]]
  $region34: #{down_block_pix_forward.7} parent=0
    _
  %s8 = ssub.s32 1, %s6
  %s9 = scalar_select 0, %s8, %s6
  $region1: #{down_block_pix_forward.7} parent=0
    #allocation2 [shape = 'u8[512]{0}', space=smem, size = 0x200, scoped, tag = 'input window, operand 3, single buffered']
    #allocation3 [shape = 's32[1]{0}', space=sflag, size = 0x4, scoped, tag = 'scoped memory for down_block_pix_forward.7']
    %10 = vsyncpa [#allocation3], 0
    // Predicated region
    $region2: #{down_block_pix_forward.7} parent=1 // pred_check
      _
    $region3: #{down_block_pix_forward.7} parent=1 // pred_check_branch
      %12 = sbr.rel (0) target = $region5
    $region4: #{down_block_pix_forward.7} parent=1 // pred_region
      _
    $region5: #{down_block_pix_forward.7} parent=1 // pred_fallthru
      _
    // Predicated region
    $region6: #{down_block_pix_forward.7} parent=1 // pred_check
      _
    $region7: #{down_block_pix_forward.7} parent=1 // pred_check_branch
      %14 = sbr.rel (0) target = $region9
    $region8: #{down_block_pix_forward.7} parent=1 // pred_region
      _
    $region9: #{down_block_pix_forward.7} parent=1 // pred_fallthru
      _
    // Predicated region
    $region10: #{down_block_pix_forward.7} parent=1 // pred_check
      _
    $region11: #{down_block_pix_forward.7} parent=1 // pred_check_branch
      %16 = sbr.rel (0) target = $region13
    $region12: #{down_block_pix_forward.7} parent=1 // pred_region
      _
    $region13: #{down_block_pix_forward.7} parent=1 // pred_fallthru
      _
    // Predicated region
    $region14: #{down_block_pix_forward.7} parent=1 // pred_check
      _
    $region15: #{down_block_pix_forward.7} parent=1 // pred_check_branch
      %18 = sbr.rel (0) target = $region17
    $region16: #{down_block_pix_forward.7} parent=1 // pred_region
      %s20 = ssub.s32 16, 16
      %21 = vsyncadd [#allocation3], %s20
      %s23 = sshll.u32 %s3, 4
      %s24 = int_to_ptr.vmem [resolvable:$true] %s23
      %26 = dma.vmem_to_smem %s24, 16, [#allocation2], [#allocation3]
    $region17: #{down_block_pix_forward.7} parent=1 // pred_fallthru
      _
    // Predicated region
    $region18: #{down_block_pix_forward.7} parent=1 // pred_check
      _
    $region19: #{down_block_pix_forward.7} parent=1 // pred_check_branch
      %28 = sbr.rel (0) target = $region21
    $region20: #{down_block_pix_forward.7} parent=1 // pred_region
      _
    $region21: #{down_block_pix_forward.7} parent=1 // pred_fallthru
      _
    // Predicated region
    $region22: #{down_block_pix_forward.7} parent=1 // pred_check
      _
    $region23: #{down_block_pix_forward.7} parent=1 // pred_check_branch
      %30 = sbr.rel (0) target = $region25
    $region24: #{down_block_pix_forward.7} parent=1 // pred_region
      %31 = dma.done [#allocation3], 16
    $region25: #{down_block_pix_forward.7} parent=1 // pred_fallthru
      _
    %32 = sfence
    %v34 = vld [vmem:[%s0] sm:$0xf]
    %v35 = vld [vmem:[%s1] sm:$0xf]
    %v36 = vld [vmem:[%s1 + $0x4] sm:$0xf]
    %v37 = vld [vmem:[%s1 + $0x8] sm:$0xf]
    %v38 = vld [vmem:[%s1 + $0xc] sm:$0xf]
    %v39 = vld [vmem:[%s1 + $0x10] sm:$0xf]
    %v40 = vld [vmem:[%s1 + $0x14] sm:$0xf]
    %v41 = vld [vmem:[%s1 + $0x18] sm:$0xf]
    %v42 = vld [vmem:[%s1 + $0x1c] sm:$0xf]
    %v43 = vld [vmem:[%s1 + $0x20] sm:$0xf]
    %v44 = vld [vmem:[%s1 + $0x24] sm:$0xf]
    %v45 = vld [vmem:[%s1 + $0x28] sm:$0xf]
    %v46 = vld [vmem:[%s1 + $0x2c] sm:$0xf]
    %v47 = vld [vmem:[%s1 + $0x30] sm:$0xf]
    %v48 = vld [vmem:[%s1 + $0x34] sm:$0xf]
    %v49 = vld [vmem:[%s1 + $0x38] sm:$0xf]
    %v50 = vld [vmem:[%s1 + $0x3c] sm:$0xf]
    %v51 = vld [vmem:[%s1 + $0x40] sm:$0xf]
    %v52 = vld [vmem:[%s1 + $0x44] sm:$0xf]
    %v53 = vld [vmem:[%s1 + $0x48] sm:$0xf]
    %v54 = vld [vmem:[%s1 + $0x4c] sm:$0xf]
    %v55 = vld [vmem:[%s1 + $0x50] sm:$0xf]
    %v56 = vld [vmem:[%s1 + $0x54] sm:$0xf]
    %v57 = vld [vmem:[%s1 + $0x58] sm:$0xf]
    %v58 = vld [vmem:[%s1 + $0x5c] sm:$0xf]
    %v59 = vld [vmem:[%s1 + $0x60] sm:$0xf]
    %v60 = vld [vmem:[%s1 + $0x64] sm:$0xf]
    %v61 = vld [vmem:[%s1 + $0x68] sm:$0xf]
    %v62 = vld [vmem:[%s1 + $0x6c] sm:$0xf]
    %v63 = vld [vmem:[%s1 + $0x70] sm:$0xf]
    %v64 = vld [vmem:[%s1 + $0x74] sm:$0xf]
    %v65 = vld [vmem:[%s1 + $0x78] sm:$0xf]
    %v66 = vld [vmem:[%s1 + $0x7c] sm:$0xf]
    %v67 = vld [vmem:[%s2] sm:$0xf]
    %69 = vset.pattern.permute.xlu0 0
    %70 = vperm.xlu0 %69, %v67
    %v71 = vpop.permute.xlu0 %70
    %v75 = vunpack.c.l.s4 1983009808
    %v76 = vunpack.c.0.s8 %v75
    %v77 = vlaneseq
    %v78 = vshrl.u32 %v77, 7
    %v79 = vsub.s32 %v76, %v78
    %v80 = vrot.slane %v34, %v79
    %v81 = vcombine.high %v80, %v80
    %v116 = vunpack.c.l.b16 %v35
    %v117 = vunpack.c.l.b16 %v36
    %v118 = vunpack.c.l.b16 %v37
    %v119 = vunpack.c.l.b16 %v38
    %v120 = vunpack.c.l.b16 %v39
    %v121 = vunpack.c.l.b16 %v40
    %v122 = vunpack.c.l.b16 %v41
    %v123 = vunpack.c.l.b16 %v42
    %v124 = vunpack.c.l.b16 %v43
    %v125 = vunpack.c.l.b16 %v44
    %v126 = vunpack.c.l.b16 %v45
    %v127 = vunpack.c.l.b16 %v46
    %v128 = vunpack.c.l.b16 %v47
    %v129 = vunpack.c.l.b16 %v48
    %v130 = vunpack.c.l.b16 %v49
    %v131 = vunpack.c.l.b16 %v50
    %v132 = vunpack.c.l.b16 %v51
    %v133 = vunpack.c.l.b16 %v52
    %v134 = vunpack.c.l.b16 %v53
    %v135 = vunpack.c.l.b16 %v54
    %v136 = vunpack.c.l.b16 %v55
    %v137 = vunpack.c.l.b16 %v56
    %v138 = vunpack.c.l.b16 %v57
    %v139 = vunpack.c.l.b16 %v58
    %v140 = vunpack.c.l.b16 %v59
    %v141 = vunpack.c.l.b16 %v60
    %v142 = vunpack.c.l.b16 %v61
    %v143 = vunpack.c.l.b16 %v62
    %v144 = vunpack.c.l.b16 %v63
    %v145 = vunpack.c.l.b16 %v64
    %v146 = vunpack.c.l.b16 %v65
    %v147 = vunpack.c.l.b16 %v66
    %v148 = vpack.c.b16 %v117, %v116
    %v149 = vpack.c.b16 %v119, %v118
    %v150 = vpack.c.b16 %v121, %v120
    %v151 = vpack.c.b16 %v123, %v122
    %v152 = vpack.c.b16 %v125, %v124
    %v153 = vpack.c.b16 %v127, %v126
    %v154 = vpack.c.b16 %v129, %v128
    %v155 = vpack.c.b16 %v131, %v130
    %v156 = vpack.c.b16 %v133, %v132
    %v157 = vpack.c.b16 %v135, %v134
    %v158 = vpack.c.b16 %v137, %v136
    %v159 = vpack.c.b16 %v139, %v138
    %v160 = vpack.c.b16 %v141, %v140
    %v161 = vpack.c.b16 %v143, %v142
    %v162 = vpack.c.b16 %v145, %v144
    %v163 = vpack.c.b16 %v147, %v146
    %180 = vmatprep.subr.bf16.mxu0 0
    %181 = vmatpush1.bf16.msra.mxu0 %v155
    %182 = vmatprep.subr.bf16.mxu0 0
    %183 = vmatpush1.bf16.msra.mxu0 %v154
    %184 = vmatprep.subr.bf16.mxu0 0
    %185 = vmatpush1.bf16.msra.mxu0 %v153
    %186 = vmatprep.subr.bf16.mxu0 0
    %187 = vmatpush1.bf16.msra.mxu0 %v152
    %188 = vmatprep.subr.bf16.mxu0 0
    %189 = vmatpush1.bf16.msra.mxu0 %v151
    %190 = vmatprep.subr.bf16.mxu0 0
    %191 = vmatpush1.bf16.msra.mxu0 %v150
    %192 = vmatprep.subr.bf16.mxu0 0
    %193 = vmatpush1.bf16.msra.mxu0 %v149
    %194 = vmatprep.subr.bf16.mxu0 0
    %195 = vmatpush1.bf16.msra.mxu0 %v148
    %196 = vmatprep.subr.bf16.mxu0 0
    %197 = vmatpush2.bf16.msra.mxu0 %v163
    %198 = vmatprep.subr.bf16.mxu0 0
    %199 = vmatpush2.bf16.msra.mxu0 %v162
    %200 = vmatprep.subr.bf16.mxu0 0
    %201 = vmatpush2.bf16.msra.mxu0 %v161
    %202 = vmatprep.subr.bf16.mxu0 0
    %203 = vmatpush2.bf16.msra.mxu0 %v160
    %204 = vmatprep.subr.bf16.mxu0 0
    %205 = vmatpush2.bf16.msra.mxu0 %v159
    %206 = vmatprep.subr.bf16.mxu0 0
    %207 = vmatpush2.bf16.msra.mxu0 %v158
    %208 = vmatprep.subr.bf16.mxu0 0
    %209 = vmatpush2.bf16.msra.mxu0 %v157
    %210 = vmatprep.subr.bf16.mxu0 0
    %211 = vmatpush2.bf16.msra.mxu0 %v156
    %212 = vmatprep.mubr.bf16.mxu0 %v81
    %213 = vmatmul.mubr.bf16.gmra.mxu0 %v80
    %v214 = vpop.f32.mrf.mxu0
    %v215 = vadd.f32 %v71, %v214
    %v216 = vpop.f32.mrf.mxu0
    %v217 = vpop.f32.mrf.mxu0
    %v218 = vpop.f32.mrf.mxu0
    %219 = vdwg.mxu0
    %s220 = sld [smem:[#allocation2]]
    %vm221 = vcmp.ge.f32.partialorder %v215, 0.0
    %v222 = vstv %s220
    %v223 = vmul.f32 %v222, %v215
    %v224 = vsel %vm221, %v215, %v223
    %s225 = sld [smem:[#allocation2 + $0x1]]
    %v226 = vld [vmem:[%s4] sm:$0xf]
    %v227 = vstv %s225
    %v228 = vmul.f32 %v227, %v226
    %v229 = vadd.f32 %v224, %v228
    %230 = vst [vmem:[%s5] sm:$0xf] %v229
    // Predicated region
    $region26: #{down_block_pix_forward.7} parent=1 // pred_check
      _
    $region27: #{down_block_pix_forward.7} parent=1 // pred_check_branch
      %232 = sbr.rel (0) target = $region29
    $region28: #{down_block_pix_forward.7} parent=1 // pred_region
      _
    $region29: #{down_block_pix_forward.7} parent=1 // pred_fallthru
      _
    // Predicated region
    $region30: #{down_block_pix_forward.7} parent=1 // pred_check
      _
    $region31: #{down_block_pix_forward.7} parent=1 // pred_check_branch
      %234 = sbr.rel (0) target = $region33
    $region32: #{down_block_pix_forward.7} parent=1 // pred_region
      _
    $region33: #{down_block_pix_forward.7} parent=1 // pred_fallthru
      _
    %235 = vsyncpa [#allocation3], 1

</llo_original>
